<compile_context>
chip_gen: v6e
topology: v6e:2x2x1
jax: 0.10.0
libtpu: 0.0.40
codegen_flags: <defaults>
</compile_context>

<pallas_src>
import functools
import numpy as np
import jax
import jax.numpy as jnp
from jax.experimental import pallas as pl
from jax.experimental.pallas import tpu as pltpu

_BN_EPS = 1e-5
_PAD = 4      # per-batch segment pad (covers the grouped conv's dilation-4 zero padding)
_MARGIN = 2   # extra global lane margin so the depthwise taps are pure static slices


# ----------------------------------------------------------------------------
# Fused Pallas kernel
# ----------------------------------------------------------------------------
def _esa_kernel(xp_ref, par_ref, gwp_ref, mask_ref, up_ref, o_ref, *, B, Ld, L, P, E):
    f32 = jnp.float32
    Lp = Ld + 2 * P
    W = B * Lp

    xp = xp_ref[...]                     # [2, Tc, W + 2E]  even-phase x, zero-margined
    par = par_ref[...]                   # [2, Tc, 8]  (5 tap weights, gamma, beta, 0)
    mask = mask_ref[...]                 # [1, 1, W]   1 on valid columns, 0 on segment pads

    def tap(o):                          # x value at relative offset o, on the W grid
        return xp[..., E + o: E + o + W]

    # --- depthwise stride-2 dilated convs (dil 2 -> offsets +-1, dil 4 -> +-2)
    #     as one uniform 5-tap stencil with per-row weights (VPU FMAs, no MXU).
    y = (par[..., 0:1] * tap(-2) + par[..., 1:2] * tap(-1) + par[..., 2:3] * tap(0)
         + par[..., 3:4] * tap(1) + par[..., 4:5] * tap(2))           # [2, Tc, W]
    y = y * mask                          # zero the per-segment pad columns

    # --- BatchNorm1d(2C), training-mode batch statistics (per row == per concat channel)
    n = float(B * Ld)
    mean = jnp.sum(y, axis=-1, keepdims=True) / n                      # [2, Tc, 1]
    var = jnp.sum(y * y, axis=-1, keepdims=True) / n - mean * mean
    scale = par[..., 5:6] * jax.lax.rsqrt(var + _BN_EPS)               # gamma * inv_std
    bias = par[..., 6:7] - mean * scale                                # beta - mean*scale
    z = y * scale + bias * mask           # pad columns stay 0 == grouped-conv zero padding

    u0 = z[0]                             # concat channel 2c      [Tc, W]
    u1 = z[1]                             # concat channel 2c + 1  [Tc, W]
    gw = gwp_ref[...]                     # [Tc, 8] grouped-conv taps (m=0: 0..2, m=1: 3..5)
    up = up_ref[...]                      # [Ld, L] linear-upsample weights

    # --- grouped conv (k=3, dil=4) fused with per-batch segment extraction, then
    #     linear upsample (the single remaining MXU matmul) and sigmoid.
    for b in range(B):
        base = b * Lp + P

        def seg(u, o, _base=base):
            return u[:, _base + o: _base + o + Ld]

        conv = (gw[:, 0:1] * seg(u0, -4) + gw[:, 1:2] * seg(u0, 0) + gw[:, 2:3] * seg(u0, 4)
                + gw[:, 3:4] * seg(u1, -4) + gw[:, 4:5] * seg(u1, 0) + gw[:, 5:6] * seg(u1, 4))
        v = jnp.dot(conv, up, preferred_element_type=f32)              # [Tc, L]
        o_ref[:, b * L:(b + 1) * L] = pl.reciprocal(
            1.0 + jnp.exp(-v), approx=True).astype(o_ref.dtype)


# ----------------------------------------------------------------------------
# Static (shape-only) upsample weights, built with numpy at trace time
# ----------------------------------------------------------------------------
def _upsample_matrix(l_in, l_out):
    """U[t, s]: torch.nn.Upsample(size=l_out, mode='linear', align_corners=False)."""
    u = np.zeros((l_in, l_out), np.float32)
    scale = l_in / l_out
    for s in range(l_out):
        src = max((s + 0.5) * scale - 0.5, 0.0)
        i0 = min(int(np.floor(src)), l_in - 1)
        i1 = min(i0 + 1, l_in - 1)
        lam = src - i0
        u[i0, s] += 1.0 - lam
        u[i1, s] += lam
    return u


# ----------------------------------------------------------------------------
# Wrapper: one pallas_call for the whole forward pass
# ----------------------------------------------------------------------------
def enhanced_spatial_attention(x, params):
    """x: [B, C, L]  ->  [B, C, L]  (Enhanced_Spatial_Attention.forward)."""
    B, C, L = x.shape
    Ld = (L - 1) // 2 + 1                 # length after the stride-2 down blocks
    P, E = _PAD, _MARGIN
    Lp = Ld + 2 * P
    W = B * Lp

    # --- static row bookkeeping: row (m, c) holds concat channel k = 2c + m --
    kk = 2 * np.arange(C)[None, :] + np.arange(2)[:, None]    # [2, C]
    src = np.where(kk < C, kk, kk - C)                        # source x channel
    is3 = kk < C                                              # dilation-2 (branch-3) rows

    # --- activations: even phase of x, per-batch zero-padded segments --------
    # (stride 2 + even dilation + even padding => convs only read even columns)
    x_even = x[:, :, ::2]                                     # [B, C, Ld]
    xsel = jnp.transpose(x_even[:, jnp.asarray(src), :], (1, 2, 0, 3))   # [2, C, B, Ld]
    xp = jnp.pad(xsel, ((0, 0), (0, 0), (0, 0), (P, P))).reshape(2, C, W)
    xp = jnp.pad(xp, ((0, 0), (0, 0), (E, E)))                # [2, C, W + 2E]

    # --- packed per-row parameters (taps -2..+2, gamma, beta) ----------------
    w3s = params["w3"][jnp.asarray(src)]                      # [2, C, 3]
    w7s = params["w7"][jnp.asarray(src)]
    zc = jnp.zeros((2, C), jnp.float32)
    taps3 = jnp.stack([zc, w3s[..., 0], w3s[..., 1], w3s[..., 2], zc], axis=-1)
    taps7 = jnp.stack([w7s[..., 0], zc, w7s[..., 1], zc, w7s[..., 2]], axis=-1)
    taps = jnp.where(jnp.asarray(is3)[..., None], taps3, taps7)          # [2, C, 5]
    kkj = jnp.asarray(kk)
    par = jnp.concatenate(
        [taps, params["gamma"][kkj][..., None], params["beta"][kkj][..., None],
         jnp.zeros((2, C, 1), jnp.float32)], axis=-1)                    # [2, C, 8]
    gwp = jnp.concatenate(
        [params["gw"].reshape(C, 6), jnp.zeros((C, 2), jnp.float32)], axis=-1)  # [C, 8]

    # --- small constants ------------------------------------------------------
    segm = np.zeros((Lp,), np.float32)
    segm[P:P + Ld] = 1.0
    mask = jnp.asarray(np.tile(segm, B))[None, None, :]       # [1, 1, W]
    up = jnp.asarray(_upsample_matrix(Ld, L))                 # [Ld, L]

    # --- channel-block grid (megacore-ready; size 1 at small C) --------------
    if C % 8 == 0:
        Tc = min(C, 64)
        while C % Tc:
            Tc -= 8
    else:
        Tc = C

    kernel = functools.partial(_esa_kernel, B=B, Ld=Ld, L=L, P=P, E=E)
    out2 = pl.pallas_call(
        kernel,
        out_shape=jax.ShapeDtypeStruct((C, B * L), jnp.float32),
        grid=(C // Tc,),
        in_specs=[
            pl.BlockSpec((2, Tc, W + 2 * E), lambda i: (0, i, 0)),
            pl.BlockSpec((2, Tc, 8),         lambda i: (0, i, 0)),
            pl.BlockSpec((Tc, 8),            lambda i: (i, 0)),
            pl.BlockSpec((1, 1, W),          lambda i: (0, 0, 0)),
            pl.BlockSpec((Ld, L),            lambda i: (0, 0)),
        ],
        out_specs=pl.BlockSpec((Tc, B * L),  lambda i: (i, 0)),
        compiler_params=pltpu.CompilerParams(dimension_semantics=("parallel",)),
    )(xp, par, gwp, mask, up)

    return out2.reshape(C, B, L).transpose(1, 0, 2)


# ----------------------------------------------------------------------------
# Deterministic parameter init (shapes as in the PyTorch __init__, all bias=False)
# ----------------------------------------------------------------------------
def init_params(key, channels):
    k1, k2, k3, k4, k5 = jax.random.split(key, 5)
    w3 = jax.random.normal(k1, (channels, 3), jnp.float32) / np.sqrt(3.0)
    w7 = jax.random.normal(k2, (channels, 3), jnp.float32) / np.sqrt(3.0)
    gw = jax.random.normal(k3, (channels, 2, 3), jnp.float32) / np.sqrt(6.0)
    gamma = 1.0 + 0.1 * jax.random.normal(k4, (2 * channels,), jnp.float32)
    beta = 0.1 * jax.random.normal(k5, (2 * channels,), jnp.float32)
    return dict(w3=w3, w7=w7, gw=gw, gamma=gamma, beta=beta)


# ----------------------------------------------------------------------------
# Pure-JAX reference (mirrors the PyTorch module) for a sanity check
# ----------------------------------------------------------------------------
def reference(x, params):
    B, C, L = x.shape
    dn = ("NCH", "OIH", "NCH")
    hi = jax.lax.Precision.HIGHEST
    y3 = jax.lax.conv_general_dilated(
        x, params["w3"].reshape(C, 1, 3), window_strides=(2,), padding=[(2, 2)],
        rhs_dilation=(2,), dimension_numbers=dn, feature_group_count=C, precision=hi)
    y7 = jax.lax.conv_general_dilated(
        x, params["w7"].reshape(C, 1, 3), window_strides=(2,), padding=[(4, 4)],
        rhs_dilation=(4,), dimension_numbers=dn, feature_group_count=C, precision=hi)
    y = jnp.concatenate([y3, y7], axis=1)                 # [B, 2C, Ld]
    mean = jnp.mean(y, axis=(0, 2), keepdims=True)
    var = jnp.mean(jnp.square(y - mean), axis=(0, 2), keepdims=True)
    y = (y - mean) * jax.lax.rsqrt(var + _BN_EPS)
    y = y * params["gamma"][None, :, None] + params["beta"][None, :, None]
    z = jax.lax.conv_general_dilated(
        y, params["gw"], window_strides=(1,), padding=[(4, 4)],
        rhs_dilation=(4,), dimension_numbers=dn, feature_group_count=C, precision=hi)
    Ld = z.shape[-1]
    scale = Ld / L                                        # align_corners=False
    s = jnp.arange(L, dtype=jnp.float32)
    src = jnp.maximum((s + 0.5) * scale - 0.5, 0.0)
    i0 = jnp.clip(jnp.floor(src).astype(jnp.int32), 0, Ld - 1)
    i1 = jnp.minimum(i0 + 1, Ld - 1)
    lam = src - i0.astype(jnp.float32)
    zu = z[..., i0] * (1.0 - lam) + z[..., i1] * lam
    return jax.nn.sigmoid(zu)


# ----------------------------------------------------------------------------
if __name__ == "__main__":
    B, C, L = 2, 4, 16                     # small shapes consistent with the module
    key = jax.random.PRNGKey(0)
    pkey, xkey = jax.random.split(key)
    params = init_params(pkey, C)
    x = jax.random.normal(xkey, (B, C, L), jnp.float32)

    out = jax.block_until_ready(jax.jit(enhanced_spatial_attention)(x, params))
    assert out.shape == (B, C, L), out.shape

    ref = jax.block_until_ready(reference(x, params))
    if not np.allclose(np.asarray(out), np.asarray(ref), rtol=1e-2, atol=1e-2):
        raise AssertionError(
            f"kernel/reference mismatch: max abs diff "
            f"{np.max(np.abs(np.asarray(out) - np.asarray(ref)))}")

    print("KERNEL_OK")

# TODO(synk): BatchNorm running_mean/running_var buffers are not updated (the fused
# forward uses training-mode batch statistics only, matching the previous version).
</pallas_src>

<mosaic_0001>
module attributes {stable_mosaic.version = 11 : i64} {
  func.func @_esa_kernel(%arg0: i32, %arg1: memref<2x4x36xf32, #tpu.memory_space<vmem>>, %arg2: memref<2x4x8xf32, #tpu.memory_space<vmem>>, %arg3: memref<4x8xf32, #tpu.memory_space<vmem>>, %arg4: memref<1x1x32xf32, #tpu.memory_space<vmem>>, %arg5: memref<8x16xf32, #tpu.memory_space<vmem>>, %arg6: memref<4x32xf32, #tpu.memory_space<vmem>>) attributes {dimension_semantics = [#tpu.dimension_semantics<parallel>], iteration_bounds = array<i64: 1>, scalar_prefetch = 0 : i64, scratch_operands = 0 : i64, tpu.core_type = #tpu.core_type<tc>, window_params = [{transform_indices = @transform_0, window_bounds = array<i64: 2, 4, 36>}, {transform_indices = @transform_1, window_bounds = array<i64: 2, 4, 8>}, {transform_indices = @transform_2, window_bounds = array<i64: 4, 8>}, {pipeline_mode = #tpu.pipeline_mode<synchronous>, transform_indices = @transform_3, window_bounds = array<i64: 1, 1, 32>}, {pipeline_mode = #tpu.pipeline_mode<synchronous>, transform_indices = @transform_4, window_bounds = array<i64: 8, 16>}, {transform_indices = @transform_5, window_bounds = array<i64: 4, 32>}]} {
    %c0 = arith.constant 0 : index
    %c0_0 = arith.constant 0 : index
    %c0_1 = arith.constant 0 : index
    %0 = vector.load %arg1[%c0, %c0_0, %c0_1] : memref<2x4x36xf32, #tpu.memory_space<vmem>>, vector<2x4x36xf32>
    %c0_2 = arith.constant 0 : index
    %c0_3 = arith.constant 0 : index
    %c0_4 = arith.constant 0 : index
    %1 = vector.load %arg2[%c0_2, %c0_3, %c0_4] : memref<2x4x8xf32, #tpu.memory_space<vmem>>, vector<2x4x8xf32>
    %c0_5 = arith.constant 0 : index
    %c0_6 = arith.constant 0 : index
    %c0_7 = arith.constant 0 : index
    %2 = vector.load %arg4[%c0_5, %c0_6, %c0_7] : memref<1x1x32xf32, #tpu.memory_space<vmem>>, vector<1x1x32xf32>
    %3 = vector.extract_strided_slice %1 {offsets = [0, 0, 0], sizes = [2, 4, 1], strides = [1, 1, 1]} : vector<2x4x8xf32> to vector<2x4x1xf32>
    %4 = vector.extract_strided_slice %0 {offsets = [0, 0, 0], sizes = [2, 4, 32], strides = [1, 1, 1]} : vector<2x4x36xf32> to vector<2x4x32xf32>
    %5 = vector.broadcast %3 : vector<2x4x1xf32> to vector<2x4x32xf32>
    %6 = arith.mulf %5, %4 : vector<2x4x32xf32>
    %7 = vector.extract_strided_slice %1 {offsets = [0, 0, 1], sizes = [2, 4, 1], strides = [1, 1, 1]} : vector<2x4x8xf32> to vector<2x4x1xf32>
    %8 = vector.extract_strided_slice %0 {offsets = [0, 0, 1], sizes = [2, 4, 32], strides = [1, 1, 1]} : vector<2x4x36xf32> to vector<2x4x32xf32>
    %9 = vector.broadcast %7 : vector<2x4x1xf32> to vector<2x4x32xf32>
    %10 = arith.mulf %9, %8 : vector<2x4x32xf32>
    %11 = arith.addf %6, %10 : vector<2x4x32xf32>
    %12 = vector.extract_strided_slice %1 {offsets = [0, 0, 2], sizes = [2, 4, 1], strides = [1, 1, 1]} : vector<2x4x8xf32> to vector<2x4x1xf32>
    %13 = vector.extract_strided_slice %0 {offsets = [0, 0, 2], sizes = [2, 4, 32], strides = [1, 1, 1]} : vector<2x4x36xf32> to vector<2x4x32xf32>
    %14 = vector.broadcast %12 : vector<2x4x1xf32> to vector<2x4x32xf32>
    %15 = arith.mulf %14, %13 : vector<2x4x32xf32>
    %16 = arith.addf %11, %15 : vector<2x4x32xf32>
    %17 = vector.extract_strided_slice %1 {offsets = [0, 0, 3], sizes = [2, 4, 1], strides = [1, 1, 1]} : vector<2x4x8xf32> to vector<2x4x1xf32>
    %18 = vector.extract_strided_slice %0 {offsets = [0, 0, 3], sizes = [2, 4, 32], strides = [1, 1, 1]} : vector<2x4x36xf32> to vector<2x4x32xf32>
    %19 = vector.broadcast %17 : vector<2x4x1xf32> to vector<2x4x32xf32>
    %20 = arith.mulf %19, %18 : vector<2x4x32xf32>
    %21 = arith.addf %16, %20 : vector<2x4x32xf32>
    %22 = vector.extract_strided_slice %1 {offsets = [0, 0, 4], sizes = [2, 4, 1], strides = [1, 1, 1]} : vector<2x4x8xf32> to vector<2x4x1xf32>
    %23 = vector.extract_strided_slice %0 {offsets = [0, 0, 4], sizes = [2, 4, 32], strides = [1, 1, 1]} : vector<2x4x36xf32> to vector<2x4x32xf32>
    %24 = vector.broadcast %22 : vector<2x4x1xf32> to vector<2x4x32xf32>
    %25 = arith.mulf %24, %23 : vector<2x4x32xf32>
    %26 = arith.addf %21, %25 : vector<2x4x32xf32>
    %27 = vector.broadcast %2 : vector<1x1x32xf32> to vector<2x4x32xf32>
    %28 = arith.mulf %26, %27 : vector<2x4x32xf32>
    %cst = arith.constant dense<0.000000e+00> : vector<2x4xf32>
    %29 = vector.multi_reduction <add>, %28, %cst [2] : vector<2x4x32xf32> to vector<2x4xf32>
    %30 = vector.shape_cast %29 : vector<2x4xf32> to vector<2x4x1xf32>
    %cst_8 = arith.constant 1.600000e+01 : f32
    %31 = vector.broadcast %cst_8 : f32 to vector<2x4x1xf32>
    %32 = arith.divf %30, %31 : vector<2x4x1xf32>
    %33 = arith.mulf %28, %28 : vector<2x4x32xf32>
    %cst_9 = arith.constant dense<0.000000e+00> : vector<2x4xf32>
    %34 = vector.multi_reduction <add>, %33, %cst_9 [2] : vector<2x4x32xf32> to vector<2x4xf32>
    %35 = vector.shape_cast %34 : vector<2x4xf32> to vector<2x4x1xf32>
    %cst_10 = arith.constant 1.600000e+01 : f32
    %36 = vector.broadcast %cst_10 : f32 to vector<2x4x1xf32>
    %37 = arith.divf %35, %36 : vector<2x4x1xf32>
    %38 = arith.mulf %32, %32 : vector<2x4x1xf32>
    %39 = arith.subf %37, %38 : vector<2x4x1xf32>
    %40 = vector.extract_strided_slice %1 {offsets = [0, 0, 5], sizes = [2, 4, 1], strides = [1, 1, 1]} : vector<2x4x8xf32> to vector<2x4x1xf32>
    %cst_11 = arith.constant 9.99999974E-6 : f32
    %41 = vector.broadcast %cst_11 : f32 to vector<2x4x1xf32>
    %42 = arith.addf %39, %41 : vector<2x4x1xf32>
    %43 = math.rsqrt %42 : vector<2x4x1xf32>
    %44 = arith.mulf %40, %43 : vector<2x4x1xf32>
    %45 = vector.extract_strided_slice %1 {offsets = [0, 0, 6], sizes = [2, 4, 1], strides = [1, 1, 1]} : vector<2x4x8xf32> to vector<2x4x1xf32>
    %46 = arith.mulf %32, %44 : vector<2x4x1xf32>
    %47 = arith.subf %45, %46 : vector<2x4x1xf32>
    %48 = vector.broadcast %44 : vector<2x4x1xf32> to vector<2x4x32xf32>
    %49 = arith.mulf %28, %48 : vector<2x4x32xf32>
    %50 = vector.broadcast %47 : vector<2x4x1xf32> to vector<2x4x32xf32>
    %51 = vector.broadcast %2 : vector<1x1x32xf32> to vector<2x4x32xf32>
    %52 = arith.mulf %50, %51 : vector<2x4x32xf32>
    %53 = arith.addf %49, %52 : vector<2x4x32xf32>
    %54 = vector.extract_strided_slice %53 {offsets = [0, 0, 0], sizes = [1, 4, 32], strides = [1, 1, 1]} : vector<2x4x32xf32> to vector<1x4x32xf32>
    %55 = vector.shape_cast %54 : vector<1x4x32xf32> to vector<4x32xf32>
    %56 = vector.extract_strided_slice %53 {offsets = [1, 0, 0], sizes = [1, 4, 32], strides = [1, 1, 1]} : vector<2x4x32xf32> to vector<1x4x32xf32>
    %57 = vector.shape_cast %56 : vector<1x4x32xf32> to vector<4x32xf32>
    %c0_12 = arith.constant 0 : index
    %c0_13 = arith.constant 0 : index
    %58 = vector.load %arg3[%c0_12, %c0_13] : memref<4x8xf32, #tpu.memory_space<vmem>>, vector<4x8xf32>
    %c0_14 = arith.constant 0 : index
    %c0_15 = arith.constant 0 : index
    %59 = vector.load %arg5[%c0_14, %c0_15] : memref<8x16xf32, #tpu.memory_space<vmem>>, vector<8x16xf32>
    %60 = vector.extract_strided_slice %58 {offsets = [0, 0], sizes = [4, 1], strides = [1, 1]} : vector<4x8xf32> to vector<4x1xf32>
    %61 = vector.extract_strided_slice %55 {offsets = [0, 0], sizes = [4, 8], strides = [1, 1]} : vector<4x32xf32> to vector<4x8xf32>
    %62 = vector.broadcast %60 : vector<4x1xf32> to vector<4x8xf32>
    %63 = arith.mulf %62, %61 : vector<4x8xf32>
    %64 = vector.extract_strided_slice %58 {offsets = [0, 1], sizes = [4, 1], strides = [1, 1]} : vector<4x8xf32> to vector<4x1xf32>
    %65 = vector.extract_strided_slice %55 {offsets = [0, 4], sizes = [4, 8], strides = [1, 1]} : vector<4x32xf32> to vector<4x8xf32>
    %66 = vector.broadcast %64 : vector<4x1xf32> to vector<4x8xf32>
    %67 = arith.mulf %66, %65 : vector<4x8xf32>
    %68 = arith.addf %63, %67 : vector<4x8xf32>
    %69 = vector.extract_strided_slice %58 {offsets = [0, 2], sizes = [4, 1], strides = [1, 1]} : vector<4x8xf32> to vector<4x1xf32>
    %70 = vector.extract_strided_slice %55 {offsets = [0, 8], sizes = [4, 8], strides = [1, 1]} : vector<4x32xf32> to vector<4x8xf32>
    %71 = vector.broadcast %69 : vector<4x1xf32> to vector<4x8xf32>
    %72 = arith.mulf %71, %70 : vector<4x8xf32>
    %73 = arith.addf %68, %72 : vector<4x8xf32>
    %74 = vector.extract_strided_slice %58 {offsets = [0, 3], sizes = [4, 1], strides = [1, 1]} : vector<4x8xf32> to vector<4x1xf32>
    %75 = vector.extract_strided_slice %57 {offsets = [0, 0], sizes = [4, 8], strides = [1, 1]} : vector<4x32xf32> to vector<4x8xf32>
    %76 = vector.broadcast %74 : vector<4x1xf32> to vector<4x8xf32>
    %77 = arith.mulf %76, %75 : vector<4x8xf32>
    %78 = arith.addf %73, %77 : vector<4x8xf32>
    %79 = vector.extract_strided_slice %58 {offsets = [0, 4], sizes = [4, 1], strides = [1, 1]} : vector<4x8xf32> to vector<4x1xf32>
    %80 = vector.extract_strided_slice %57 {offsets = [0, 4], sizes = [4, 8], strides = [1, 1]} : vector<4x32xf32> to vector<4x8xf32>
    %81 = vector.broadcast %79 : vector<4x1xf32> to vector<4x8xf32>
    %82 = arith.mulf %81, %80 : vector<4x8xf32>
    %83 = arith.addf %78, %82 : vector<4x8xf32>
    %84 = vector.extract_strided_slice %58 {offsets = [0, 5], sizes = [4, 1], strides = [1, 1]} : vector<4x8xf32> to vector<4x1xf32>
    %85 = vector.extract_strided_slice %57 {offsets = [0, 8], sizes = [4, 8], strides = [1, 1]} : vector<4x32xf32> to vector<4x8xf32>
    %86 = vector.broadcast %84 : vector<4x1xf32> to vector<4x8xf32>
    %87 = arith.mulf %86, %85 : vector<4x8xf32>
    %88 = arith.addf %83, %87 : vector<4x8xf32>
    %cst_16 = arith.constant dense<0.000000e+00> : vector<4x16xf32>
    %89 = tpu.matmul %88, %59, %cst_16 {dimension_numbers = #tpu.dot_dimension_numbers<[1], [0], [0], [1], [0, 0, 1, 1], [], []>} : vector<4x8xf32>, vector<8x16xf32>, vector<4x16xf32> -> vector<4x16xf32>
    %cst_17 = arith.constant 0.000000e+00 : f32
    %90 = vector.broadcast %cst_17 : f32 to vector<4x16xf32>
    %91 = arith.subf %90, %89 : vector<4x16xf32>
    %92 = math.exp %91 : vector<4x16xf32>
    %cst_18 = arith.constant 1.000000e+00 : f32
    %93 = vector.broadcast %cst_18 : f32 to vector<4x16xf32>
    %94 = arith.addf %93, %92 : vector<4x16xf32>
    %95 = tpu.reciprocal %94 {approx = true} : vector<4x16xf32> -> vector<4x16xf32>
    %c0_19 = arith.constant 0 : index
    %c0_20 = arith.constant 0 : index
    %96 = vector.load %arg6[%c0_19, %c0_20] : memref<4x32xf32, #tpu.memory_space<vmem>>, vector<4x16xf32>
    tpu.vector_store %arg6[%c0_19, %c0_20], %95 {strides = array<i32>} : memref<4x32xf32, #tpu.memory_space<vmem>>, vector<4x16xf32>,
    %97 = vector.extract_strided_slice %58 {offsets = [0, 0], sizes = [4, 1], strides = [1, 1]} : vector<4x8xf32> to vector<4x1xf32>
    %98 = vector.extract_strided_slice %55 {offsets = [0, 16], sizes = [4, 8], strides = [1, 1]} : vector<4x32xf32> to vector<4x8xf32>
    %99 = vector.broadcast %97 : vector<4x1xf32> to vector<4x8xf32>
    %100 = arith.mulf %99, %98 : vector<4x8xf32>
    %101 = vector.extract_strided_slice %58 {offsets = [0, 1], sizes = [4, 1], strides = [1, 1]} : vector<4x8xf32> to vector<4x1xf32>
    %102 = vector.extract_strided_slice %55 {offsets = [0, 20], sizes = [4, 8], strides = [1, 1]} : vector<4x32xf32> to vector<4x8xf32>
    %103 = vector.broadcast %101 : vector<4x1xf32> to vector<4x8xf32>
    %104 = arith.mulf %103, %102 : vector<4x8xf32>
    %105 = arith.addf %100, %104 : vector<4x8xf32>
    %106 = vector.extract_strided_slice %58 {offsets = [0, 2], sizes = [4, 1], strides = [1, 1]} : vector<4x8xf32> to vector<4x1xf32>
    %107 = vector.extract_strided_slice %55 {offsets = [0, 24], sizes = [4, 8], strides = [1, 1]} : vector<4x32xf32> to vector<4x8xf32>
    %108 = vector.broadcast %106 : vector<4x1xf32> to vector<4x8xf32>
    %109 = arith.mulf %108, %107 : vector<4x8xf32>
    %110 = arith.addf %105, %109 : vector<4x8xf32>
    %111 = vector.extract_strided_slice %58 {offsets = [0, 3], sizes = [4, 1], strides = [1, 1]} : vector<4x8xf32> to vector<4x1xf32>
    %112 = vector.extract_strided_slice %57 {offsets = [0, 16], sizes = [4, 8], strides = [1, 1]} : vector<4x32xf32> to vector<4x8xf32>
    %113 = vector.broadcast %111 : vector<4x1xf32> to vector<4x8xf32>
    %114 = arith.mulf %113, %112 : vector<4x8xf32>
    %115 = arith.addf %110, %114 : vector<4x8xf32>
    %116 = vector.extract_strided_slice %58 {offsets = [0, 4], sizes = [4, 1], strides = [1, 1]} : vector<4x8xf32> to vector<4x1xf32>
    %117 = vector.extract_strided_slice %57 {offsets = [0, 20], sizes = [4, 8], strides = [1, 1]} : vector<4x32xf32> to vector<4x8xf32>
    %118 = vector.broadcast %116 : vector<4x1xf32> to vector<4x8xf32>
    %119 = arith.mulf %118, %117 : vector<4x8xf32>
    %120 = arith.addf %115, %119 : vector<4x8xf32>
    %121 = vector.extract_strided_slice %58 {offsets = [0, 5], sizes = [4, 1], strides = [1, 1]} : vector<4x8xf32> to vector<4x1xf32>
    %122 = vector.extract_strided_slice %57 {offsets = [0, 24], sizes = [4, 8], strides = [1, 1]} : vector<4x32xf32> to vector<4x8xf32>
    %123 = vector.broadcast %121 : vector<4x1xf32> to vector<4x8xf32>
    %124 = arith.mulf %123, %122 : vector<4x8xf32>
    %125 = arith.addf %120, %124 : vector<4x8xf32>
    %cst_21 = arith.constant dense<0.000000e+00> : vector<4x16xf32>
    %126 = tpu.matmul %125, %59, %cst_21 {dimension_numbers = #tpu.dot_dimension_numbers<[1], [0], [0], [1], [0, 0, 1, 1], [], []>} : vector<4x8xf32>, vector<8x16xf32>, vector<4x16xf32> -> vector<4x16xf32>
    %cst_22 = arith.constant 0.000000e+00 : f32
    %127 = vector.broadcast %cst_22 : f32 to vector<4x16xf32>
    %128 = arith.subf %127, %126 : vector<4x16xf32>
    %129 = math.exp %128 : vector<4x16xf32>
    %cst_23 = arith.constant 1.000000e+00 : f32
    %130 = vector.broadcast %cst_23 : f32 to vector<4x16xf32>
    %131 = arith.addf %130, %129 : vector<4x16xf32>
    %132 = tpu.reciprocal %131 {approx = true} : vector<4x16xf32> -> vector<4x16xf32>
    %c0_24 = arith.constant 0 : index
    %c16 = arith.constant 16 : index
    %133 = vector.load %arg6[%c0_24, %c16] : memref<4x32xf32, #tpu.memory_space<vmem>>, vector<4x16xf32>
    tpu.vector_store %arg6[%c0_24, %c16], %132 {strides = array<i32>} : memref<4x32xf32, #tpu.memory_space<vmem>>, vector<4x16xf32>,
    return
  }
  func.func @transform_0(%arg0: i32) -> (i32, i32, i32) {
    %c0_i32 = arith.constant 0 : i32
    %c0_i32_0 = arith.constant 0 : i32
    %c0_i32_1 = arith.constant 0 : i32
    return %c0_i32, %arg0, %c0_i32_0 : i32, i32, i32
  }
  func.func @transform_1(%arg0: i32) -> (i32, i32, i32) {
    %c0_i32 = arith.constant 0 : i32
    %c0_i32_0 = arith.constant 0 : i32
    %c0_i32_1 = arith.constant 0 : i32
    return %c0_i32, %arg0, %c0_i32_0 : i32, i32, i32
  }
  func.func @transform_2(%arg0: i32) -> (i32, i32) {
    %c0_i32 = arith.constant 0 : i32
    %c0_i32_0 = arith.constant 0 : i32
    return %arg0, %c0_i32 : i32, i32
  }
  func.func @transform_3(%arg0: i32) -> (i32, i32, i32) {
    %c0_i32 = arith.constant 0 : i32
    %c0_i32_0 = arith.constant 0 : i32
    %c0_i32_1 = arith.constant 0 : i32
    %c0_i32_2 = arith.constant 0 : i32
    return %c0_i32, %c0_i32_0, %c0_i32_1 : i32, i32, i32
  }
  func.func @transform_4(%arg0: i32) -> (i32, i32) {
    %c0_i32 = arith.constant 0 : i32
    %c0_i32_0 = arith.constant 0 : i32
    %c0_i32_1 = arith.constant 0 : i32
    return %c0_i32, %c0_i32_0 : i32, i32
  }
  func.func @transform_5(%arg0: i32) -> (i32, i32) {
    %c0_i32 = arith.constant 0 : i32
    %c0_i32_0 = arith.constant 0 : i32
    return %arg0, %c0_i32 : i32, i32
  }
}

</mosaic_0001>

<llo_original>
// kernel: enhanced_spatial_attention.1
$region0: #{enhanced_spatial_attention.1}
  #allocation0 [shape = 'u32[]', space=smem, size = 0x4, offset = 0x4, fixed_abs, tag = 'smem constant byte address 0x4 - core index']
  #allocation1 [shape = 'u32[144,128]{1,0:T(1,128)}', space=vmem, size = 0x12000, scoped, tag = 'internal scratch']
  %s0 = inlined_call_operand.vmem [shape: f32[2,4,36], index: 0, kind: input, shape index: {}]
  %s1 = inlined_call_operand.vmem [shape: f32[2,4,8], index: 1, kind: input, shape index: {}]
  %s2 = inlined_call_operand.vmem [shape: f32[4,8], index: 2, kind: input, shape index: {}]
  %s3 = inlined_call_operand.vmem [shape: f32[1,1,32], index: 3, kind: input, shape index: {}]
  %s4 = inlined_call_operand.vmem [shape: f32[8,16], index: 4, kind: input, shape index: {}]
  %s5 = inlined_call_operand.vmem [shape: f32[4,32], index: 5, kind: output, shape index: {}]
  %s6 = sld [smem:[#allocation0]]
  $region30: #{enhanced_spatial_attention.1} parent=0
    _
  %s8 = ssub.s32 1, %s6
  %s9 = scalar_select 0, %s8, %s6
  // Predicated region
  $region2: #{enhanced_spatial_attention.1} parent=0 // pred_check
    _
  $region3: #{enhanced_spatial_attention.1} parent=0 // pred_check_branch
    %11 = sbr.rel (0) target = $region5
  $region4: #{enhanced_spatial_attention.1} parent=0 // pred_region
    _
  $region5: #{enhanced_spatial_attention.1} parent=0 // pred_fallthru
    _
  // Predicated region
  $region6: #{enhanced_spatial_attention.1} parent=0 // pred_check
    _
  $region7: #{enhanced_spatial_attention.1} parent=0 // pred_check_branch
    %13 = sbr.rel (0) target = $region9
  $region8: #{enhanced_spatial_attention.1} parent=0 // pred_region
    _
  $region9: #{enhanced_spatial_attention.1} parent=0 // pred_fallthru
    _
  // Predicated region
  $region10: #{enhanced_spatial_attention.1} parent=0 // pred_check
    _
  $region11: #{enhanced_spatial_attention.1} parent=0 // pred_check_branch
    %15 = sbr.rel (0) target = $region13
  $region12: #{enhanced_spatial_attention.1} parent=0 // pred_region
    _
  $region13: #{enhanced_spatial_attention.1} parent=0 // pred_fallthru
    _
  // Predicated region
  $region14: #{enhanced_spatial_attention.1} parent=0 // pred_check
    _
  $region15: #{enhanced_spatial_attention.1} parent=0 // pred_check_branch
    %17 = sbr.rel (0) target = $region17
  $region16: #{enhanced_spatial_attention.1} parent=0 // pred_region
    _
  $region17: #{enhanced_spatial_attention.1} parent=0 // pred_fallthru
    _
  // Predicated region
  $region18: #{enhanced_spatial_attention.1} parent=0 // pred_check
    _
  $region19: #{enhanced_spatial_attention.1} parent=0 // pred_check_branch
    %19 = sbr.rel (0) target = $region21
  $region20: #{enhanced_spatial_attention.1} parent=0 // pred_region
    _
  $region21: #{enhanced_spatial_attention.1} parent=0 // pred_fallthru
    _
  %v20 = vld [vmem:[%s0] sm:$0xf]
  %v21 = vld [vmem:[%s0 + $0x4] sm:$0xf]
  %v22 = vld [vmem:[%s1] sm:$0xf]
  %v23 = vld [vmem:[%s1 + $0x4] sm:$0xf]
  %v24 = vld [vmem:[%s3] sm:$0x1]
  %26 = vset.pattern.permute.xlu0 0
  %27 = vperm.xlu0 %26, %v22
  %v28 = vpop.permute.xlu0 %27
  %31 = vset.pattern.permute.xlu0 0
  %32 = vperm.xlu0 %31, %v23
  %v33 = vpop.permute.xlu0 %32
  %v35 = vmul.f32 %v28, %v20
  %v36 = vmul.f32 %v33, %v21
  %37 = vset.pattern.permute.xlu0 1
  %38 = vperm.xlu0 %37, %v22
  %v39 = vpop.permute.xlu0 %38
  %41 = vset.pattern.permute.xlu0 1
  %42 = vperm.xlu0 %41, %v23
  %v43 = vpop.permute.xlu0 %42
  %v45 = vmul.f32 %v39, %v20
  %v46 = vmul.f32 %v43, %v21
  %49 = vrot.lane.b32.xlu0 %v45, 127
  %v50 = vpop.permute.xlu0 %49
  %51 = vrot.lane.b32.xlu0 %v46, 127
  %v52 = vpop.permute.xlu0 %51
  %v55 = vadd.f32 %v35, %v50
  %v56 = vadd.f32 %v36, %v52
  %57 = vset.pattern.permute.xlu0 2
  %58 = vperm.xlu0 %57, %v22
  %v59 = vpop.permute.xlu0 %58
  %61 = vset.pattern.permute.xlu0 2
  %62 = vperm.xlu0 %61, %v23
  %v63 = vpop.permute.xlu0 %62
  %v65 = vmul.f32 %v59, %v20
  %v66 = vmul.f32 %v63, %v21
  %69 = vrot.lane.b32.xlu0 %v65, 126
  %v70 = vpop.permute.xlu0 %69
  %71 = vrot.lane.b32.xlu0 %v66, 126
  %v72 = vpop.permute.xlu0 %71
  %v75 = vadd.f32 %v55, %v70
  %v76 = vadd.f32 %v56, %v72
  %77 = vset.pattern.permute.xlu0 3
  %78 = vperm.xlu0 %77, %v22
  %v79 = vpop.permute.xlu0 %78
  %81 = vset.pattern.permute.xlu0 3
  %82 = vperm.xlu0 %81, %v23
  %v83 = vpop.permute.xlu0 %82
  %v85 = vmul.f32 %v79, %v20
  %v86 = vmul.f32 %v83, %v21
  %89 = vrot.lane.b32.xlu0 %v85, 125
  %v90 = vpop.permute.xlu0 %89
  %91 = vrot.lane.b32.xlu0 %v86, 125
  %v92 = vpop.permute.xlu0 %91
  %v95 = vadd.f32 %v75, %v90
  %v96 = vadd.f32 %v76, %v92
  %97 = vset.pattern.permute.xlu0 4
  %98 = vperm.xlu0 %97, %v22
  %v99 = vpop.permute.xlu0 %98
  %101 = vset.pattern.permute.xlu0 4
  %102 = vperm.xlu0 %101, %v23
  %v103 = vpop.permute.xlu0 %102
  %v105 = vmul.f32 %v99, %v20
  %v106 = vmul.f32 %v103, %v21
  %109 = vrot.lane.b32.xlu0 %v105, 124
  %v110 = vpop.permute.xlu0 %109
  %111 = vrot.lane.b32.xlu0 %v106, 124
  %v112 = vpop.permute.xlu0 %111
  %v115 = vadd.f32 %v95, %v110
  %v116 = vadd.f32 %v96, %v112
  %v118 = vlaneseq
  %v119 = vshrl.u32 %v118, 7
  %v120 = vsub.s32 0, %v119
  %v121 = vrot.slane %v24, %v120
  %v123 = vmul.f32 %v115, %v121
  %v124 = vmul.f32 %v116, %v121
  %vm125 = vcmask 257024
  %v126 = vsel %vm125, %v123, 0.0
  %127 = vadd.xlane.f32.xlu0 %v126
  %v128 = vpop.xlane.xlu0 %127
  %v129 = vsel %vm125, %v124, 0.0
  %130 = vadd.xlane.f32.xlu0 %v129
  %v131 = vpop.xlane.xlu0 %130
  %v132 = vrcp.pop 16.0
  %v133 = vmul.f32 %v128, %v132
  %v134 = vmul.f32 %v131, %v132
  %v135 = vmul.f32 %v123, %v123
  %v136 = vmul.f32 %v124, %v124
  %v137 = vsel %vm125, %v135, 0.0
  %138 = vadd.xlane.f32.xlu0 %v137
  %v139 = vpop.xlane.xlu0 %138
  %v140 = vsel %vm125, %v136, 0.0
  %141 = vadd.xlane.f32.xlu0 %v140
  %v142 = vpop.xlane.xlu0 %141
  %v143 = vmul.f32 %v139, %v132
  %v144 = vmul.f32 %v142, %v132
  %v145 = vmul.f32 %v133, %v133
  %v146 = vmul.f32 %v134, %v134
  %v147 = vsub.f32 %v143, %v145
  %v148 = vsub.f32 %v144, %v146
  %v149 = vadd.f32 %v147, 1e-05
  %v150 = vadd.f32 %v148, 1e-05
  %v151 = vrsqrt.pop %v149
  %v152 = vrsqrt.pop %v150
  %v153 = vmul.f32 %v22, %v151
  %v154 = vmul.f32 %v23, %v152
  %v155 = vmul.f32 %v133, %v153
  %v156 = vmul.f32 %v134, %v154
  %159 = vrot.lane.b32.xlu0 %v155, 1
  %v160 = vpop.permute.xlu0 %159
  %161 = vrot.lane.b32.xlu0 %v156, 1
  %v162 = vpop.permute.xlu0 %161
  %v165 = vsub.f32 %v22, %v160
  %v166 = vsub.f32 %v23, %v162
  %168 = vset.pattern.permute.xlu0 5
  %169 = vperm.xlu0 %168, %v153
  %v170 = vpop.permute.xlu0 %169
  %173 = vset.pattern.permute.xlu0 5
  %174 = vperm.xlu0 %173, %v154
  %v175 = vpop.permute.xlu0 %174
  %v177 = vmul.f32 %v123, %v170
  %v178 = vmul.f32 %v124, %v175
  %180 = vset.pattern.permute.xlu0 6
  %181 = vperm.xlu0 %180, %v165
  %v182 = vpop.permute.xlu0 %181
  %185 = vset.pattern.permute.xlu0 6
  %186 = vperm.xlu0 %185, %v166
  %v187 = vpop.permute.xlu0 %186
  %v189 = vmul.f32 %v182, %v121
  %v190 = vmul.f32 %v187, %v121
  %v191 = vadd.f32 %v177, %v189
  %v192 = vadd.f32 %v178, %v190
  %v193 = vld [vmem:[%s2] sm:$0xf]
  %v194 = vld [vmem:[%s4] sm:$0xff]
  %196 = vset.pattern.permute.xlu0 0
  %197 = vperm.xlu0 %196, %v193
  %v198 = vpop.permute.xlu0 %197
  %v200 = vmul.f32 %v198, %v191
  %201 = vset.pattern.permute.xlu0 1
  %202 = vperm.xlu0 %201, %v193
  %v203 = vpop.permute.xlu0 %202
  %v205 = vmul.f32 %v203, %v191
  %207 = vrot.lane.b32.xlu0 %v205, 124
  %v208 = vpop.permute.xlu0 %207
  %v210 = vadd.f32 %v200, %v208
  %211 = vset.pattern.permute.xlu0 2
  %212 = vperm.xlu0 %211, %v193
  %v213 = vpop.permute.xlu0 %212
  %v215 = vmul.f32 %v213, %v191
  %217 = vrot.lane.b32.xlu0 %v215, 120
  %v218 = vpop.permute.xlu0 %217
  %v220 = vadd.f32 %v210, %v218
  %221 = vset.pattern.permute.xlu0 3
  %222 = vperm.xlu0 %221, %v193
  %v223 = vpop.permute.xlu0 %222
  %v225 = vmul.f32 %v223, %v192
  %v226 = vadd.f32 %v220, %v225
  %227 = vset.pattern.permute.xlu0 4
  %228 = vperm.xlu0 %227, %v193
  %v229 = vpop.permute.xlu0 %228
  %v231 = vmul.f32 %v229, %v192
  %233 = vrot.lane.b32.xlu0 %v231, 124
  %v234 = vpop.permute.xlu0 %233
  %v236 = vadd.f32 %v226, %v234
  %237 = vset.pattern.permute.xlu0 5
  %238 = vperm.xlu0 %237, %v193
  %v239 = vpop.permute.xlu0 %238
  %v241 = vmul.f32 %v239, %v192
  %243 = vrot.lane.b32.xlu0 %v241, 120
  %v244 = vpop.permute.xlu0 %243
  %v246 = vadd.f32 %v236, %v244
  %vm247 = vcmask 64512
  %v249 = vsel %vm247, %v246, 0
  %251 = vmatprep.subr.mxu0 0.0
  %252 = vmatpush1.msra.mxu0 0.0
  %253 = vmatprep.subr.mxu0 0.0
  %254 = vmatpush1.msra.mxu0 0.0
  %255 = vmatprep.subr.mxu0 0.0
  %256 = vmatpush1.msra.mxu0 0.0
  %257 = vmatprep.subr.mxu0 0.0
  %258 = vmatpush1.msra.mxu0 0.0
  %259 = vmatprep.subr.mxu0 0.0
  %260 = vmatpush1.msra.mxu0 0.0
  %261 = vmatprep.subr.mxu0 0.0
  %262 = vmatpush1.msra.mxu0 0.0
  %263 = vmatprep.subr.mxu0 0.0
  %264 = vmatpush1.msra.mxu0 0.0
  %265 = vmatprep.subr.mxu0 0.0
  %266 = vmatpush1.msra.mxu0 0.0
  %267 = vmatprep.subr.mxu0 0.0
  %268 = vmatpush1.msra.mxu0 0.0
  %269 = vmatprep.subr.mxu0 0.0
  %270 = vmatpush1.msra.mxu0 0.0
  %271 = vmatprep.subr.mxu0 0.0
  %272 = vmatpush1.msra.mxu0 0.0
  %273 = vmatprep.subr.mxu0 0.0
  %274 = vmatpush1.msra.mxu0 0.0
  %275 = vmatprep.subr.mxu0 0.0
  %276 = vmatpush1.msra.mxu0 0.0
  %277 = vmatprep.subr.mxu0 0.0
  %278 = vmatpush1.msra.mxu0 0.0
  %279 = vmatprep.subr.mxu0 0.0
  %280 = vmatpush1.msra.mxu0 0.0
  %281 = vmatprep.subr.mxu0 0.0
  %282 = vmatpush1.msra.mxu0 %v194
  %283 = vmatprep.subr.mxu0 0.0
  %284 = vmatpush2.msra.mxu0 0.0
  %285 = vmatprep.subr.mxu0 0.0
  %286 = vmatpush2.msra.mxu0 0.0
  %287 = vmatprep.subr.mxu0 0.0
  %288 = vmatpush2.msra.mxu0 0.0
  %289 = vmatprep.subr.mxu0 0.0
  %290 = vmatpush2.msra.mxu0 0.0
  %291 = vmatprep.subr.mxu0 0.0
  %292 = vmatpush2.msra.mxu0 0.0
  %293 = vmatprep.subr.mxu0 0.0
  %294 = vmatpush2.msra.mxu0 0.0
  %295 = vmatprep.subr.mxu0 0.0
  %296 = vmatpush2.msra.mxu0 0.0
  %297 = vmatprep.subr.mxu0 0.0
  %298 = vmatpush2.msra.mxu0 0.0
  %299 = vmatprep.subr.mxu0 0.0
  %300 = vmatpush2.msra.mxu0 0.0
  %301 = vmatprep.subr.mxu0 0.0
  %302 = vmatpush2.msra.mxu0 0.0
  %303 = vmatprep.subr.mxu0 0.0
  %304 = vmatpush2.msra.mxu0 0.0
  %305 = vmatprep.subr.mxu0 0.0
  %306 = vmatpush2.msra.mxu0 0.0
  %307 = vmatprep.subr.mxu0 0.0
  %308 = vmatpush2.msra.mxu0 0.0
  %309 = vmatprep.subr.mxu0 0.0
  %310 = vmatpush2.msra.mxu0 0.0
  %311 = vmatprep.subr.mxu0 0.0
  %312 = vmatpush2.msra.mxu0 0.0
  %313 = vmatprep.subr.mxu0 0.0
  %314 = vmatpush2.msra.mxu0 0.0
  %315 = vmatprep.mubr.f32.mxu0 0.0
  %316 = vmatmul.mubr.f32.gmra.mxu0 %v249
  %v317 = vpop.f32.mrf.mxu0
  %v318 = vadd.f32 0.0, %v317
  %v319 = vpop.f32.mrf.mxu0
  %320 = vdwg.mxu0
  %v321 = vsub.f32 0.0, %v318
  %v322 = vmul.f32 %v321, 1.442695
  %v323 = vpow.pop %v322
  %v324 = vadd.f32 %v323, 1.0
  %v325 = vrcp.pop %v324
  %vm326 = vcmask 125952
  %327 = vst.msk [vmem:[%s5] sm:$0xf] %vm326, %v325
  %328 = vrot.lane.b32.xlu0 %v246, 112
  %v329 = vpop.permute.xlu0 %328
  %v330 = vsel %vm247, %v329, 0
  %332 = vmatprep.subr.mxu0 0.0
  %333 = vmatpush1.msra.mxu0 0.0
  %334 = vmatprep.subr.mxu0 0.0
  %335 = vmatpush1.msra.mxu0 0.0
  %336 = vmatprep.subr.mxu0 0.0
  %337 = vmatpush1.msra.mxu0 0.0
  %338 = vmatprep.subr.mxu0 0.0
  %339 = vmatpush1.msra.mxu0 0.0
  %340 = vmatprep.subr.mxu0 0.0
  %341 = vmatpush1.msra.mxu0 0.0
  %342 = vmatprep.subr.mxu0 0.0
  %343 = vmatpush1.msra.mxu0 0.0
  %344 = vmatprep.subr.mxu0 0.0
  %345 = vmatpush1.msra.mxu0 0.0
  %346 = vmatprep.subr.mxu0 0.0
  %347 = vmatpush1.msra.mxu0 0.0
  %348 = vmatprep.subr.mxu0 0.0
  %349 = vmatpush1.msra.mxu0 0.0
  %350 = vmatprep.subr.mxu0 0.0
  %351 = vmatpush1.msra.mxu0 0.0
  %352 = vmatprep.subr.mxu0 0.0
  %353 = vmatpush1.msra.mxu0 0.0
  %354 = vmatprep.subr.mxu0 0.0
  %355 = vmatpush1.msra.mxu0 0.0
  %356 = vmatprep.subr.mxu0 0.0
  %357 = vmatpush1.msra.mxu0 0.0
  %358 = vmatprep.subr.mxu0 0.0
  %359 = vmatpush1.msra.mxu0 0.0
  %360 = vmatprep.subr.mxu0 0.0
  %361 = vmatpush1.msra.mxu0 0.0
  %362 = vmatprep.subr.mxu0 0.0
  %363 = vmatpush1.msra.mxu0 %v194
  %364 = vmatprep.subr.mxu0 0.0
  %365 = vmatpush2.msra.mxu0 0.0
  %366 = vmatprep.subr.mxu0 0.0
  %367 = vmatpush2.msra.mxu0 0.0
  %368 = vmatprep.subr.mxu0 0.0
  %369 = vmatpush2.msra.mxu0 0.0
  %370 = vmatprep.subr.mxu0 0.0
  %371 = vmatpush2.msra.mxu0 0.0
  %372 = vmatprep.subr.mxu0 0.0
  %373 = vmatpush2.msra.mxu0 0.0
  %374 = vmatprep.subr.mxu0 0.0
  %375 = vmatpush2.msra.mxu0 0.0
  %376 = vmatprep.subr.mxu0 0.0
  %377 = vmatpush2.msra.mxu0 0.0
  %378 = vmatprep.subr.mxu0 0.0
  %379 = vmatpush2.msra.mxu0 0.0
  %380 = vmatprep.subr.mxu0 0.0
  %381 = vmatpush2.msra.mxu0 0.0
  %382 = vmatprep.subr.mxu0 0.0
  %383 = vmatpush2.msra.mxu0 0.0
  %384 = vmatprep.subr.mxu0 0.0
  %385 = vmatpush2.msra.mxu0 0.0
  %386 = vmatprep.subr.mxu0 0.0
  %387 = vmatpush2.msra.mxu0 0.0
  %388 = vmatprep.subr.mxu0 0.0
  %389 = vmatpush2.msra.mxu0 0.0
  %390 = vmatprep.subr.mxu0 0.0
  %391 = vmatpush2.msra.mxu0 0.0
  %392 = vmatprep.subr.mxu0 0.0
  %393 = vmatpush2.msra.mxu0 0.0
  %394 = vmatprep.subr.mxu0 0.0
  %395 = vmatpush2.msra.mxu0 0.0
  %396 = vmatprep.mubr.f32.mxu0 0.0
  %397 = vmatmul.mubr.f32.gmra.mxu0 %v330
  %v398 = vpop.f32.mrf.mxu0
  %v399 = vadd.f32 0.0, %v398
  %v400 = vpop.f32.mrf.mxu0
  %401 = vdwg.mxu0
  %v402 = vsub.f32 0.0, %v399
  %v403 = vmul.f32 %v402, 1.442695
  %v404 = vpow.pop %v403
  %v405 = vadd.f32 %v404, 1.0
  %v406 = vrcp.pop %v405
  %408 = vrot.lane.b32.xlu0 %v406, 16
  %v409 = vpop.permute.xlu0 %408
  %vm411 = vcmask 257152
  %412 = vst.msk [vmem:[%s5] sm:$0xf] %vm411, %v409
  // Predicated region
  $region22: #{enhanced_spatial_attention.1} parent=0 // pred_check
    _
  $region23: #{enhanced_spatial_attention.1} parent=0 // pred_check_branch
    %414 = sbr.rel (0) target = $region25
  $region24: #{enhanced_spatial_attention.1} parent=0 // pred_region
    _
  $region25: #{enhanced_spatial_attention.1} parent=0 // pred_fallthru
    _
  // Predicated region
  $region26: #{enhanced_spatial_attention.1} parent=0 // pred_check
    _
  $region27: #{enhanced_spatial_attention.1} parent=0 // pred_check_branch
    %416 = sbr.rel (0) target = $region29
  $region28: #{enhanced_spatial_attention.1} parent=0 // pred_region
    _
  $region29: #{enhanced_spatial_attention.1} parent=0 // pred_fallthru
    _

</llo_original>
